<compile_context>
chip_gen: v7x
topology: tpu7x:2x2x1
jax: 0.10.0
libtpu: 0.0.40
codegen_flags: <defaults>
</compile_context>

<pallas_src>
import functools

import jax
import jax.numpy as jnp
from jax.experimental import pallas as pl
from jax.experimental.pallas import tpu as pltpu


def _apply_noise_kernel(w_ref, x_ref, n_ref, o_ref):
    # w_ref : VMEM (C_blk, 1)      -- per-channel scales for this block
    # x_ref : VMEM (C_blk, L_blk)  -- x[b, c0:c0+C_blk, l0:l0+L_blk]
    # n_ref : VMEM (1, L_blk)      -- noise[b, 0, l0:l0+L_blk]
    # o_ref : VMEM (C_blk, L_blk)
    # Single fused VPU mul-add per vreg; w broadcasts over lanes, n over sublanes.
    o_ref[...] = x_ref[...] + w_ref[...] * n_ref[...]


def _choose_blocks(C, L, itemsize):
    """Pick (C_blk, L_blk) that are lane/sublane legal and a few MiB at most."""
    # Lane block: multiple of 128 dividing L (or the full L), capped.
    lane_cap = 16384
    if L <= lane_cap or L % 128 != 0:
        l_blk = L
    else:
        l_blk = lane_cap - (lane_cap % 128)
        while l_blk > 128 and L % l_blk != 0:
            l_blk -= 128
        if L % l_blk != 0:
            l_blk = L
    # Channel block: keep the x tile around <= 2 MiB (so x+noise+out, each
    # double-buffered, stays comfortably under the 16 MiB v5e scoped default).
    budget = 2 * 1024 * 1024
    max_cb = max(1, budget // (l_blk * itemsize))
    if C <= max_cb:
        c_blk = C
    else:
        c_blk = max(8, (max_cb // 8) * 8)
        while c_blk > 8 and C % c_blk != 0:
            c_blk -= 8
        if C % c_blk != 0 or c_blk % 8 != 0:
            c_blk = C  # fallback: full channel dim (always legal)
    return c_blk, l_blk


@functools.partial(jax.jit, static_argnames=("c_blk", "l_blk"))
def apply_noise(x, weight, noise, *, c_blk=None, l_blk=None):
    """x: (B,C,H,W), weight: (C,), noise: (B,1,H,W) -> (B,C,H,W)."""
    B, C, H, W = x.shape
    assert weight.shape == (C,)
    assert noise.shape == (B, 1, H, W)
    L = H * W

    # Lane-dense flattening: last dim becomes H*W (multiple of 128 for the
    # shapes this model produces), instead of a 16-wide W.
    x3 = x.reshape(B, C, L)
    n3 = noise.reshape(B, 1, L).astype(x.dtype)
    w2 = weight.reshape(C, 1).astype(x.dtype)

    itemsize = jnp.dtype(x.dtype).itemsize
    auto_cb, auto_lb = _choose_blocks(C, L, itemsize)
    cb = auto_cb if c_blk is None else c_blk
    lb = auto_lb if l_blk is None else l_blk
    assert C % cb == 0 and (cb % 8 == 0 or cb == C), (C, cb)
    assert L % lb == 0 and (lb % 128 == 0 or lb == L), (L, lb)

    # Grid: channel axis innermost so the noise block index (b, 0, l) is
    # unchanged across consecutive steps -> its DMA is skipped.
    grid = (B, L // lb, C // cb)

    w_spec = pl.BlockSpec((cb, 1), lambda b, l, c: (c, 0))
    x_spec = pl.BlockSpec((pl.Squeezed(), cb, lb), lambda b, l, c: (b, c, l))
    n_spec = pl.BlockSpec((pl.Squeezed(), 1, lb), lambda b, l, c: (b, 0, l))
    o_spec = pl.BlockSpec((pl.Squeezed(), cb, lb), lambda b, l, c: (b, c, l))

    out3 = pl.pallas_call(
        _apply_noise_kernel,
        out_shape=jax.ShapeDtypeStruct((B, C, L), x.dtype),
        grid_spec=pltpu.PrefetchScalarGridSpec(
            num_scalar_prefetch=0,
            grid=grid,
            in_specs=[w_spec, x_spec, n_spec],
            out_specs=o_spec,
        ),
        compiler_params=pltpu.CompilerParams(
            dimension_semantics=("parallel", "parallel", "arbitrary")
        ),
    )(w2, x3, n3)

    return out3.reshape(B, C, H, W)


def apply_noise_module(x, weight, noise=None, *, noise_key=None):
    """Mirror of ApplyNoise.forward; generates N(0,1) noise if not supplied."""
    if noise is None:
        if noise_key is None:
            noise_key = jax.random.PRNGKey(0)
        noise = jax.random.normal(
            noise_key, (x.shape[0], 1, x.shape[2], x.shape[3]), dtype=x.dtype
        )
    return apply_noise(x, weight, noise)


if __name__ == "__main__":
    key = jax.random.PRNGKey(0)
    k1, k2, k3, k4, k5 = jax.random.split(key, 5)

    # --- Case 1: decoder-like small shape -------------------------------
    B, C, H, W = 2, 4, 16, 16
    x = jax.random.normal(k1, (B, C, H, W), dtype=jnp.float32)
    noise = jax.random.normal(k2, (B, 1, H, W), dtype=jnp.float32)

    # Module init: weight = zeros(channels)  (matches nn.Parameter(torch.zeros(C)))
    w_zero = jnp.zeros((C,), dtype=jnp.float32)
    out0 = apply_noise_module(x, w_zero, noise)
    jax.block_until_ready(out0)
    ref0 = x + w_zero.reshape(1, C, 1, 1) * noise
    assert jnp.allclose(out0, ref0, atol=1e-6), "mismatch with zero weight"

    # Nonzero weight exercises the broadcast math.
    w_nz = jax.random.normal(k3, (C,), dtype=jnp.float32) * 0.02
    out1 = apply_noise_module(x, w_nz, noise)
    jax.block_until_ready(out1)
    ref1 = x + w_nz.reshape(1, C, 1, 1) * noise
    assert jnp.allclose(out1, ref1, atol=1e-5), "mismatch with nonzero weight"

    # --- Case 2: force multi-block tiling (c_blk=8, l_blk=128) ----------
    B2, C2, H2, W2 = 2, 16, 16, 16
    x2 = jax.random.normal(k4, (B2, C2, H2, W2), dtype=jnp.float32)
    n2 = jax.random.normal(k5, (B2, 1, H2, W2), dtype=jnp.float32)
    w2 = jax.random.normal(k3, (C2,), dtype=jnp.float32) * 0.02
    out2 = apply_noise(x2, w2, n2, c_blk=8, l_blk=128)
    jax.block_until_ready(out2)
    ref2 = x2 + w2.reshape(1, C2, 1, 1) * n2
    assert jnp.allclose(out2, ref2, atol=1e-5), "mismatch on tiled path"

    # --- Default-noise path (noise=None -> internally generated N(0,1)) --
    out3 = apply_noise_module(x, w_nz, None, noise_key=jax.random.PRNGKey(42))
    jax.block_until_ready(out3)

    print("KERNEL_OK")
</pallas_src>

<mosaic_0001>
module attributes {stable_mosaic.version = 11 : i64} {
  func.func @_apply_noise_kernel(%arg0: i32, %arg1: i32, %arg2: i32, %arg3: memref<4x1xf32, #tpu.memory_space<vmem>>, %arg4: memref<1x4x256xf32, #tpu.memory_space<vmem>>, %arg5: memref<1x1x256xf32, #tpu.memory_space<vmem>>, %arg6: memref<1x4x256xf32, #tpu.memory_space<vmem>>) attributes {dimension_semantics = [#tpu.dimension_semantics<parallel>, #tpu.dimension_semantics<parallel>, #tpu.dimension_semantics<arbitrary>], iteration_bounds = array<i64: 2, 1, 1>, scalar_prefetch = 0 : i64, scratch_operands = 0 : i64, tpu.core_type = #tpu.core_type<tc>, window_params = [{transform_indices = @transform_0, window_bounds = array<i64: 4, 1>}, {transform_indices = @transform_1, window_bounds = array<i64: 1, 4, 256>}, {transform_indices = @transform_2, window_bounds = array<i64: 1, 1, 256>}, {transform_indices = @transform_3, window_bounds = array<i64: 1, 4, 256>}]} {
    %c0 = arith.constant 0 : index
    %c0_0 = arith.constant 0 : index
    %c0_1 = arith.constant 0 : index
    %0 = vector.load %arg4[%c0, %c0_0, %c0_1] : memref<1x4x256xf32, #tpu.memory_space<vmem>>, vector<1x4x256xf32>
    %1 = vector.shape_cast %0 : vector<1x4x256xf32> to vector<4x256xf32>
    %c0_2 = arith.constant 0 : index
    %c0_3 = arith.constant 0 : index
    %2 = vector.load %arg3[%c0_2, %c0_3] : memref<4x1xf32, #tpu.memory_space<vmem>>, vector<4x1xf32>
    %c0_4 = arith.constant 0 : index
    %c0_5 = arith.constant 0 : index
    %c0_6 = arith.constant 0 : index
    %3 = vector.load %arg5[%c0_4, %c0_5, %c0_6] : memref<1x1x256xf32, #tpu.memory_space<vmem>>, vector<1x1x256xf32>
    %4 = vector.shape_cast %3 : vector<1x1x256xf32> to vector<1x256xf32>
    %5 = vector.broadcast %2 : vector<4x1xf32> to vector<4x256xf32>
    %6 = vector.broadcast %4 : vector<1x256xf32> to vector<4x256xf32>
    %7 = arith.mulf %5, %6 : vector<4x256xf32>
    %8 = arith.addf %1, %7 : vector<4x256xf32>
    %c0_7 = arith.constant 0 : index
    %c0_8 = arith.constant 0 : index
    %c0_9 = arith.constant 0 : index
    %9 = vector.load %arg6[%c0_7, %c0_8, %c0_9] : memref<1x4x256xf32, #tpu.memory_space<vmem>>, vector<1x4x256xf32>
    %10 = vector.shape_cast %9 : vector<1x4x256xf32> to vector<4x256xf32>
    %11 = vector.shape_cast %8 : vector<4x256xf32> to vector<1x4x256xf32>
    tpu.vector_store %arg6[%c0_7, %c0_8, %c0_9], %11 {strides = array<i32>} : memref<1x4x256xf32, #tpu.memory_space<vmem>>, vector<1x4x256xf32>,
    return
  }
  func.func @transform_0(%arg0: i32, %arg1: i32, %arg2: i32) -> (i32, i32) {
    %c0_i32 = arith.constant 0 : i32
    %c0_i32_0 = arith.constant 0 : i32
    return %arg2, %c0_i32 : i32, i32
  }
  func.func @transform_1(%arg0: i32, %arg1: i32, %arg2: i32) -> (i32, i32, i32) {
    %c0_i32 = arith.constant 0 : i32
    return %arg0, %arg2, %arg1 : i32, i32, i32
  }
  func.func @transform_2(%arg0: i32, %arg1: i32, %arg2: i32) -> (i32, i32, i32) {
    %c0_i32 = arith.constant 0 : i32
    %c0_i32_0 = arith.constant 0 : i32
    return %arg0, %c0_i32, %arg1 : i32, i32, i32
  }
  func.func @transform_3(%arg0: i32, %arg1: i32, %arg2: i32) -> (i32, i32, i32) {
    %c0_i32 = arith.constant 0 : i32
    return %arg0, %arg2, %arg1 : i32, i32, i32
  }
}

</mosaic_0001>

<llo_original>
// kernel: apply_noise.1
$region0: #{apply_noise.1}
  #allocation0 [shape = 'u32[]', space=smem, size = 0x4, offset = 0x4, fixed_abs, tag = 'smem constant byte address 0x4 - core index']
  #allocation1 [shape = 'u32[144,128]{1,0:T(1,128)}', space=vmem, size = 0x12000, scoped, tag = 'internal scratch']
  %s0 = inlined_call_operand.vmem [shape: f32[4,1], index: 0, kind: input, shape index: {}]
  %s1 = inlined_call_operand.vmem [shape: f32[2,4,256], index: 1, kind: input, shape index: {}]
  %s2 = inlined_call_operand.vmem [shape: f32[2,1,256], index: 2, kind: input, shape index: {}]
  %s3 = inlined_call_operand.vmem [shape: f32[2,4,256], index: 3, kind: output, shape index: {}]
  %s4 = sld [smem:[#allocation0]]
  $region45: #{apply_noise.1} parent=0
    _
  %s6 = ssub.s32 1, %s4
  %s7 = scalar_select 0, %s6, %s4
  loop: start=0, step=1, limit=4
  $region2: #{apply_noise.1} parent=0 // loop_pre_header
    _
  $region3: #{apply_noise.1} parent=0 // loop_header
    %s9 = sphi 0, %s13
    %p10 = scmp.ge.s32.totalorder %s9, 4
    %s16 = sphi 0, %s35
    %s17 = sphi 0, %s31
    %s18 = sphi 0, %s27
    %s19 = sphi 0, %s16
    %s20 = sphi 0, %s17
    %s21 = sphi 0, %s18
    %s22 = sphi 0, %s19
    %s23 = sphi 0, %s20
    %s24 = sphi 0, %s21
    %s38 = sphi 0, %s40
    %s41 = sphi 0, %s38
    %s42 = sphi 0, %s41
    %s58 = sphi 0, %s42
    %s68 = sphi 0, %s70
    %s71 = sphi 0, %s68
    %s72 = sphi 0, %s71
    %s88 = sphi 0, %s72
    %s96 = sphi 0, %s98
    %s99 = sphi 0, %s96
    %s100 = sphi 0, %s99
    %s116 = sphi 0, %s100
    %s126 = sphi 0, %s128
    %s129 = sphi 0, %s126
    %s130 = sphi 0, %s129
    %s146 = sphi 0, %s130
  $region4: #{apply_noise.1} parent=0 // loop_header_branch
    %12 = sbr.rel (%p10) target = $region8
  $region5: #{apply_noise.1} parent=0 // loop_body
    %s14 = ssub.s32 %s9, 1
    %s15 = ssub.s32 %s9, 2
    %s25 = sadd.s32 1, %s18
    %p26 = scmp.ge.s32.totalorder %s25, 1
    %s27 = scalar_select %p26, 0, %s25
    %s28 = sadd.s32 1, %s17
    %s29 = scalar_select %p26, %s28, %s17
    %p30 = scmp.ge.s32.totalorder %s29, 1
    %s31 = scalar_select %p30, 0, %s29
    %s32 = sadd.s32 1, %s16
    %s33 = scalar_select %p30, %s32, %s16
    %p34 = scmp.ge.s32.totalorder %s33, 2
    %s35 = scalar_select %p34, 0, %s33
    %s36 = ssub.s32 %s18, %s27
    %p37 = scmp.eq.s32.totalorder %s36, 0
    %s39 = sadd.s32 %s38, 1
    %s40 = scalar_select %p37, %s38, %s39
    %p43 = pneg %p37
    %p44 = scmp.eq.s32.totalorder %s9, 1
    %p45 = por %p43, %p44
    %p46 = scmp.ne.s32.totalorder %s38, %s41
    %p47 = scmp.eq.s32.totalorder %s9, 0
    %p48 = por %p46, %p47
    %p49 = scmp.ne.s32.totalorder %s38, %s41
    %p50 = scmp.eq.s32.totalorder %s14, 1
    %p51 = por %p49, %p50
    %p52 = scmp.ne.s32.totalorder %s41, %s42
    %p53 = scmp.eq.s32.totalorder %s14, 0
    %p54 = por %p52, %p53
    %p55 = scmp.ne.s32.totalorder %s41, %s42
    %p56 = scmp.eq.s32.totalorder %s15, 1
    %p57 = por %p55, %p56
    %p59 = scmp.ne.s32.totalorder %s42, %s58
    %p60 = scmp.eq.s32.totalorder %s15, 0
    %p61 = por %p59, %p60
    %s62 = ssub.s32 %s16, %s35
    %s63 = ssub.s32 %s18, %s27
    %s64 = sor.u32 %s62, %s63
    %s65 = ssub.s32 %s17, %s31
    %s66 = sor.u32 %s64, %s65
    %p67 = scmp.eq.s32.totalorder %s66, 0
    %s69 = sadd.s32 %s68, 1
    %s70 = scalar_select %p67, %s68, %s69
    %p73 = pneg %p67
    %p74 = scmp.eq.s32.totalorder %s9, 1
    %p75 = por %p73, %p74
    %p76 = scmp.ne.s32.totalorder %s68, %s71
    %p77 = scmp.eq.s32.totalorder %s9, 0
    %p78 = por %p76, %p77
    %p79 = scmp.ne.s32.totalorder %s68, %s71
    %p80 = scmp.eq.s32.totalorder %s14, 1
    %p81 = por %p79, %p80
    %p82 = scmp.ne.s32.totalorder %s71, %s72
    %p83 = scmp.eq.s32.totalorder %s14, 0
    %p84 = por %p82, %p83
    %p85 = scmp.ne.s32.totalorder %s71, %s72
    %p86 = scmp.eq.s32.totalorder %s15, 1
    %p87 = por %p85, %p86
    %p89 = scmp.ne.s32.totalorder %s72, %s88
    %p90 = scmp.eq.s32.totalorder %s15, 0
    %p91 = por %p89, %p90
    %s92 = ssub.s32 %s16, %s35
    %s93 = ssub.s32 %s17, %s31
    %s94 = sor.u32 %s92, %s93
    %p95 = scmp.eq.s32.totalorder %s94, 0
    %s97 = sadd.s32 %s96, 1
    %s98 = scalar_select %p95, %s96, %s97
    %p101 = pneg %p95
    %p102 = scmp.eq.s32.totalorder %s9, 1
    %p103 = por %p101, %p102
    %p104 = scmp.ne.s32.totalorder %s96, %s99
    %p105 = scmp.eq.s32.totalorder %s9, 0
    %p106 = por %p104, %p105
    %p107 = scmp.ne.s32.totalorder %s96, %s99
    %p108 = scmp.eq.s32.totalorder %s14, 1
    %p109 = por %p107, %p108
    %p110 = scmp.ne.s32.totalorder %s99, %s100
    %p111 = scmp.eq.s32.totalorder %s14, 0
    %p112 = por %p110, %p111
    %p113 = scmp.ne.s32.totalorder %s99, %s100
    %p114 = scmp.eq.s32.totalorder %s15, 1
    %p115 = por %p113, %p114
    %p117 = scmp.ne.s32.totalorder %s100, %s116
    %p118 = scmp.eq.s32.totalorder %s15, 0
    %p119 = por %p117, %p118
    %s120 = ssub.s32 %s16, %s35
    %s121 = ssub.s32 %s18, %s27
    %s122 = sor.u32 %s120, %s121
    %s123 = ssub.s32 %s17, %s31
    %s124 = sor.u32 %s122, %s123
    %p125 = scmp.eq.s32.totalorder %s124, 0
    %s127 = sadd.s32 %s126, 1
    %s128 = scalar_select %p125, %s126, %s127
    %p131 = pneg %p125
    %p132 = scmp.eq.s32.totalorder %s9, 1
    %p133 = por %p131, %p132
    %p134 = scmp.ne.s32.totalorder %s126, %s129
    %p135 = scmp.eq.s32.totalorder %s9, 0
    %p136 = por %p134, %p135
    %p137 = scmp.ne.s32.totalorder %s126, %s129
    %p138 = scmp.eq.s32.totalorder %s14, 1
    %p139 = por %p137, %p138
    %p140 = scmp.ne.s32.totalorder %s129, %s130
    %p141 = scmp.eq.s32.totalorder %s14, 0
    %p142 = por %p140, %p141
    %p143 = scmp.ne.s32.totalorder %s129, %s130
    %p144 = scmp.eq.s32.totalorder %s15, 1
    %p145 = por %p143, %p144
    %p147 = scmp.ne.s32.totalorder %s130, %s146
    %p148 = scmp.eq.s32.totalorder %s15, 0
    %p149 = por %p147, %p148
    %p150 = scmp.le.s32.totalorder 1, %s9
    %p151 = scmp.lt.s32.totalorder %s9, 3
    %p152 = pnand %p150, %p151
    %p153 = pneg %p152
    // Predicated region
    $region9: #{apply_noise.1} parent=5 // pred_check
      _
    $region10: #{apply_noise.1} parent=5 // pred_check_branch
      %155 = sbr.rel (%p152) target = $region12
    $region11: #{apply_noise.1} parent=5 // pred_region
      %s156 = ssub.s32 %s9, 1
      // Predicated region
      $region13: #{apply_noise.1} parent=11 // pred_check
        %p157 = pneg %p54
      $region14: #{apply_noise.1} parent=11 // pred_check_branch
        %159 = sbr.rel (%p157) target = $region16
      $region15: #{apply_noise.1} parent=11 // pred_region
        %p160 = scmp.lt.s32.totalorder %s21, 0
        %s161 = scalar_select %p160, %s21, 0
        %s162 = smul.addr %s161, 4
        %s163 = scalar_lea.vmem %s0, %s162
      $region16: #{apply_noise.1} parent=11 // pred_fallthru
        _
    $region12: #{apply_noise.1} parent=5 // pred_fallthru
      _
    %p164 = scmp.lt.s32.totalorder %s9, 2
    // Predicated region
    $region17: #{apply_noise.1} parent=5 // pred_check
      %p165 = pneg %p164
    $region18: #{apply_noise.1} parent=5 // pred_check_branch
      %167 = sbr.rel (%p165) target = $region20
    $region19: #{apply_noise.1} parent=5 // pred_region
      // Predicated region
      $region21: #{apply_noise.1} parent=19 // pred_check
        %p168 = pneg %p78
      $region22: #{apply_noise.1} parent=19 // pred_check_branch
        %170 = sbr.rel (%p168) target = $region24
      $region23: #{apply_noise.1} parent=19 // pred_region
        %s171 = smul.u32 2, %s17
        %p172 = scmp.lt.s32.totalorder %s16, 1
        %s173 = scalar_select %p172, %s16, 1
        %p174 = scmp.lt.s32.totalorder %s18, 0
        %s175 = scalar_select %p174, %s18, 0
        %p176 = scmp.lt.s32.totalorder %s171, 1
        %s177 = scalar_select %p176, %s171, 1
        %s178 = smul.addr %s175, 2
        %s179 = sadd.s32 %s177, %s178
        %s180 = smul.addr %s173, 2
        %s181 = sadd.s32 %s179, %s180
        %s182 = smul.addr %s181, 4
        %s183 = scalar_lea.vmem %s1, %s182
        %s184 = smul.u32 2, %s17
      $region24: #{apply_noise.1} parent=19 // pred_fallthru
        _
      // Predicated region
      $region25: #{apply_noise.1} parent=19 // pred_check
        %p185 = pneg %p106
      $region26: #{apply_noise.1} parent=19 // pred_check_branch
        %187 = sbr.rel (%p185) target = $region28
      $region27: #{apply_noise.1} parent=19 // pred_region
        %s188 = smul.u32 2, %s17
        %p189 = scmp.lt.s32.totalorder %s16, 1
        %s190 = scalar_select %p189, %s16, 1
        %p191 = scmp.lt.s32.totalorder %s188, 1
        %s192 = scalar_select %p191, %s188, 1
        %s193 = smul.addr %s190, 2
        %s194 = sadd.s32 %s192, %s193
        %s195 = scalar_lea.vmem %s2, %s194
        %s196 = smul.u32 2, %s17
      $region28: #{apply_noise.1} parent=19 // pred_fallthru
        _
    $region20: #{apply_noise.1} parent=5 // pred_fallthru
      _
    %p197 = scmp.le.s32.totalorder 1, %s9
    %p198 = scmp.lt.s32.totalorder %s9, 3
    %p199 = pnand %p197, %p198
    %p200 = pneg %p199
    // Predicated region
    $region29: #{apply_noise.1} parent=5 // pred_check
      _
    $region30: #{apply_noise.1} parent=5 // pred_check_branch
      %202 = sbr.rel (%p199) target = $region32
    $region31: #{apply_noise.1} parent=5 // pred_region
      %s203 = ssub.s32 %s9, 1
      %p204 = scmp.lt.s32.totalorder %s21, 0
      %s205 = scalar_select %p204, %s21, 0
      %s206 = smul.addr %s205, 4
      %s207 = scalar_lea.vmem %s0, %s206
      %p208 = pneg %p54
      %p209 = pneg %p51
      %s210 = smul.u32 2, %s20
      %p211 = scmp.lt.s32.totalorder %s19, 1
      %s212 = scalar_select %p211, %s19, 1
      %p213 = scmp.lt.s32.totalorder %s21, 0
      %s214 = scalar_select %p213, %s21, 0
      %p215 = scmp.lt.s32.totalorder %s210, 1
      %s216 = scalar_select %p215, %s210, 1
      %s217 = smul.addr %s214, 2
      %s218 = sadd.s32 %s216, %s217
      %s219 = smul.addr %s212, 2
      %s220 = sadd.s32 %s218, %s219
      %s221 = smul.addr %s220, 4
      %s222 = scalar_lea.vmem %s1, %s221
      %p223 = pneg %p84
      %p224 = pneg %p81
      %s225 = smul.u32 2, %s20
      %p226 = scmp.lt.s32.totalorder %s19, 1
      %s227 = scalar_select %p226, %s19, 1
      %p228 = scmp.lt.s32.totalorder %s225, 1
      %s229 = scalar_select %p228, %s225, 1
      %s230 = smul.addr %s227, 2
      %s231 = sadd.s32 %s229, %s230
      %s232 = scalar_lea.vmem %s2, %s231
      %p233 = pneg %p112
      %p234 = pneg %p109
      %p235 = pneg %p142
      %p236 = pneg %p139
      %s237 = smul.u32 2, %s20
      %p238 = scmp.lt.s32.totalorder %s19, 1
      %s239 = scalar_select %p238, %s19, 1
      %p240 = scmp.lt.s32.totalorder %s21, 0
      %s241 = scalar_select %p240, %s21, 0
      %p242 = scmp.lt.s32.totalorder %s237, 1
      %s243 = scalar_select %p242, %s237, 1
      %s244 = smul.addr %s241, 2
      %s245 = sadd.s32 %s243, %s244
      %s246 = smul.addr %s239, 2
      %s247 = sadd.s32 %s245, %s246
      %s248 = smul.addr %s247, 4
      %s249 = scalar_lea.vmem %s3, %s248
      %p250 = scmp.lt.s32.totalorder %s21, 0
      %s251 = scalar_select %p250, %s21, 0
      %s252 = smul.addr %s251, 4
      %s253 = scalar_lea.vmem %s0, %s252
      %s254 = smul.u32 2, %s20
      %p255 = scmp.lt.s32.totalorder %s19, 1
      %s256 = scalar_select %p255, %s19, 1
      %p257 = scmp.lt.s32.totalorder %s21, 0
      %s258 = scalar_select %p257, %s21, 0
      %p259 = scmp.lt.s32.totalorder %s254, 1
      %s260 = scalar_select %p259, %s254, 1
      %s261 = smul.addr %s258, 2
      %s262 = sadd.s32 %s260, %s261
      %s263 = smul.addr %s256, 2
      %s264 = sadd.s32 %s262, %s263
      %s265 = smul.addr %s264, 4
      %s266 = scalar_lea.vmem %s1, %s265
      %s267 = smul.u32 2, %s20
      %s268 = smul.u32 2, %s20
      %p269 = scmp.lt.s32.totalorder %s19, 1
      %s270 = scalar_select %p269, %s19, 1
      %p271 = scmp.lt.s32.totalorder %s268, 1
      %s272 = scalar_select %p271, %s268, 1
      %s273 = smul.addr %s270, 2
      %s274 = sadd.s32 %s272, %s273
      %s275 = scalar_lea.vmem %s2, %s274
      %s276 = smul.u32 2, %s20
      %s277 = smul.u32 2, %s20
      %p278 = scmp.lt.s32.totalorder %s19, 1
      %s279 = scalar_select %p278, %s19, 1
      %p280 = scmp.lt.s32.totalorder %s21, 0
      %s281 = scalar_select %p280, %s21, 0
      %p282 = scmp.lt.s32.totalorder %s277, 1
      %s283 = scalar_select %p282, %s277, 1
      %s284 = smul.addr %s281, 2
      %s285 = sadd.s32 %s283, %s284
      %s286 = smul.addr %s279, 2
      %s287 = sadd.s32 %s285, %s286
      %s288 = smul.addr %s287, 4
      %s289 = scalar_lea.vmem %s3, %s288
      %s290 = smul.u32 2, %s20
      %v291 = vld [vmem:[%s266] sm:$0xff]
      %v292 = vld [vmem:[%s253] sm:$0xf]
      %v293 = vld [vmem:[%s275] sm:$0x3]
      %295 = vset.pattern.permute.xlu0 0
      %296 = vperm.xlu0 %295, %v292
      %v297 = vpop.permute.xlu0 %296
      %v300 = vlaneseq
      %v301 = vshrl.u32 %v300, 7
      %v302 = vsub.s32 0, %v301
      %v303 = vrot.slane %v293, %v302
      %v304 = vlaneseq
      %v305 = vshrl.u32 %v304, 7
      %v306 = vsub.s32 1, %v305
      %v307 = vrot.slane %v293, %v306
      %v310 = vmul.f32 %v297, %v303
      %v311 = vmul.f32 %v297, %v307
      %v314 = vcombine.low %v310, %v311
      %v316 = vadd.f32 %v291, %v314
      %317 = vst [vmem:[%s289] sm:$0xff] %v316
      %s318 = smul.u32 2, %s20
      %p319 = scmp.lt.s32.totalorder %s19, 1
      %s320 = scalar_select %p319, %s19, 1
      %p321 = scmp.lt.s32.totalorder %s21, 0
      %s322 = scalar_select %p321, %s21, 0
      %p323 = scmp.lt.s32.totalorder %s318, 1
      %s324 = scalar_select %p323, %s318, 1
      %s325 = smul.addr %s322, 2
      %s326 = sadd.s32 %s324, %s325
      %s327 = smul.addr %s320, 2
      %s328 = sadd.s32 %s326, %s327
      %s329 = smul.addr %s328, 4
      %s330 = scalar_lea.vmem %s3, %s329
      // Predicated region
      $region33: #{apply_noise.1} parent=31 // pred_check
        %p331 = pneg %p139
      $region34: #{apply_noise.1} parent=31 // pred_check_branch
        %333 = sbr.rel (%p331) target = $region36
      $region35: #{apply_noise.1} parent=31 // pred_region
        %s334 = smul.u32 2, %s20
      $region36: #{apply_noise.1} parent=31 // pred_fallthru
        _
    $region32: #{apply_noise.1} parent=5 // pred_fallthru
      _
    %p335 = scmp.le.s32.totalorder 2, %s9
    // Predicated region
    $region37: #{apply_noise.1} parent=5 // pred_check
      %p336 = pneg %p335
    $region38: #{apply_noise.1} parent=5 // pred_check_branch
      %338 = sbr.rel (%p336) target = $region40
    $region39: #{apply_noise.1} parent=5 // pred_region
      %s339 = ssub.s32 %s9, 2
      // Predicated region
      $region41: #{apply_noise.1} parent=39 // pred_check
        %p340 = pneg %p145
      $region42: #{apply_noise.1} parent=39 // pred_check_branch
        %342 = sbr.rel (%p340) target = $region44
      $region43: #{apply_noise.1} parent=39 // pred_region
        %s343 = smul.u32 2, %s23
        %p344 = scmp.lt.s32.totalorder %s22, 1
        %s345 = scalar_select %p344, %s22, 1
        %p346 = scmp.lt.s32.totalorder %s24, 0
        %s347 = scalar_select %p346, %s24, 0
        %p348 = scmp.lt.s32.totalorder %s343, 1
        %s349 = scalar_select %p348, %s343, 1
        %s350 = smul.addr %s347, 2
        %s351 = sadd.s32 %s349, %s350
        %s352 = smul.addr %s345, 2
        %s353 = sadd.s32 %s351, %s352
        %s354 = smul.addr %s353, 4
        %s355 = scalar_lea.vmem %s3, %s354
      $region44: #{apply_noise.1} parent=39 // pred_fallthru
        _
    $region40: #{apply_noise.1} parent=5 // pred_fallthru
      _
  $region6: #{apply_noise.1} parent=0 // loop_footer
    %s13 = sadd.s32 1, %s9
  $region7: #{apply_noise.1} parent=0 // loop_footer_branch
    %8 = sbr.rel target = $region3
  $region8: #{apply_noise.1} parent=0 // loop_exit
    _

</llo_original>
